<compile_context>
chip_gen: v7x
topology: tpu7x:2x2x1
jax: 0.10.0
libtpu: 0.0.40
codegen_flags: <defaults>
</compile_context>

<pallas_src>
import functools

import jax
import jax.numpy as jnp
from jax.experimental import pallas as pl
from jax.experimental.pallas import tpu as pltpu


def _round_up(x: int, m: int) -> int:
    return ((x + m - 1) // m) * m


def _mlp_kernel(x_ref,
                w1t_ref, b1t_ref,
                w2t_ref, b2t_ref,
                w3t_ref, b3t_ref,
                w4t_ref, b4t_ref,
                o_ref,
                *, output_dim: int):
    # One transpose at the top puts the batch on the 128-lane axis; every
    # hidden activation below is then fully lane-dense.
    x_t = x_ref[...].T                                                    # (Din, bt)

    h = jnp.dot(w1t_ref[...], x_t, preferred_element_type=jnp.float32) + b1t_ref[...]
    h = jnp.maximum(h, 0.0)                                               # (64, bt)

    h = jnp.dot(w2t_ref[...], h, preferred_element_type=jnp.float32) + b2t_ref[...]
    h = jnp.maximum(h, 0.0)                                               # (32, bt)

    h = jnp.dot(w3t_ref[...], h, preferred_element_type=jnp.float32) + b3t_ref[...]
    h = jnp.maximum(h, 0.0)                                               # (16, bt)

    z_t = (jnp.dot(w4t_ref[...], h, preferred_element_type=jnp.float32)
           + b4t_ref[...])                                                # (Dout, bt)

    if output_dim == 1:
        # Exact sigmoid (approximate reciprocal previously failed the 1e-3 check).
        out_t = 1.0 / (1.0 + jnp.exp(-z_t))
    else:
        # Softmax over the class axis (= axis 0 here). Per-lane reduction, so
        # garbage batch lanes of a partial edge tile stay confined to their lane.
        m = jnp.max(z_t, axis=0, keepdims=True)
        e = jnp.exp(z_t - m)
        out_t = e / jnp.sum(e, axis=0, keepdims=True)

    # Store (bt, Dout) directly; out-of-range rows of a partial edge block are
    # masked by Pallas, so no wrapper-side pad or transpose-back is needed.
    o_ref[...] = out_t.T.astype(o_ref.dtype)


def sequential_model_forward(x, params, *, output_dim: int, batch_tile: int = 1024):
    """x: (B, input_dim) float32. params: w1..w4 stored [in, out], b1..b4 [1, out]."""
    x = x.astype(jnp.float32)
    B, input_dim = x.shape

    # ---- batch-tile selection (no padding; partial edge block is masked) ----
    bt_cap = max(128, (batch_tile // 128) * 128)
    if B <= 256:
        bt = B                                   # single full-array block
    else:
        # Lane-aligned tile, sized so the grid has >= 2 steps (megacore/pipelining).
        bt = min(bt_cap, _round_up(pl.cdiv(B, 2), 128))
    grid = (pl.cdiv(B, bt),)

    # Weights fed transposed ((fout, fin)) and biases as (fout, 1) columns so the
    # whole network runs in the batch-on-lanes layout. These arrays are tiny, so
    # transposing them in the wrapper is negligible next to activation traffic.
    w1t, b1t = params["w1"].T, params["b1"].reshape(-1, 1)
    w2t, b2t = params["w2"].T, params["b2"].reshape(-1, 1)
    w3t, b3t = params["w3"].T, params["b3"].reshape(-1, 1)
    w4t, b4t = params["w4"].T, params["b4"].reshape(-1, 1)

    full = lambda arr: pl.BlockSpec(arr.shape, lambda i: (0, 0))
    kernel = functools.partial(_mlp_kernel, output_dim=output_dim)

    h1, h2, h3 = w1t.shape[0], w2t.shape[0], w3t.shape[0]
    n_params = (input_dim * h1 + h1 + h1 * h2 + h2 + h2 * h3 + h3
                + h3 * output_dim + output_dim)
    cost = pl.CostEstimate(
        flops=2 * B * (input_dim * h1 + h1 * h2 + h2 * h3 + h3 * output_dim),
        transcendentals=B * output_dim,
        bytes_accessed=4 * (B * input_dim + B * output_dim + n_params),
    )

    return pl.pallas_call(
        kernel,
        out_shape=jax.ShapeDtypeStruct((B, output_dim), jnp.float32),
        grid_spec=pltpu.PrefetchScalarGridSpec(
            num_scalar_prefetch=0,
            grid=grid,
            in_specs=[
                pl.BlockSpec((bt, input_dim), lambda i: (i, 0)),   # x batch tile
                full(w1t), full(b1t),
                full(w2t), full(b2t),
                full(w3t), full(b3t),
                full(w4t), full(b4t),
            ],
            out_specs=pl.BlockSpec((bt, output_dim), lambda i: (i, 0)),
        ),
        compiler_params=pltpu.CompilerParams(
            dimension_semantics=("parallel",),
        ),
        cost_estimate=cost,
    )(x, w1t, b1t, w2t, b2t, w3t, b3t, w4t, b4t)


def init_params(key, input_dim, output_dim):
    """Deterministic init mirroring nn.Linear shapes (stored transposed: [in, out])."""
    dims = [(input_dim, 64), (64, 32), (32, 16), (16, output_dim)]
    params = {}
    for idx, (fin, fout) in enumerate(dims, start=1):
        key, kw, kb = jax.random.split(key, 3)
        bound = 1.0 / jnp.sqrt(fin)  # PyTorch default Linear init range
        params[f"w{idx}"] = jax.random.uniform(
            kw, (fin, fout), jnp.float32, minval=-bound, maxval=bound)
        params[f"b{idx}"] = jax.random.uniform(
            kb, (1, fout), jnp.float32, minval=-bound, maxval=bound)
    return params


def reference_forward(x, params, output_dim):
    h = jnp.maximum(x @ params["w1"] + params["b1"], 0.0)
    h = jnp.maximum(h @ params["w2"] + params["b2"], 0.0)
    h = jnp.maximum(h @ params["w3"] + params["b3"], 0.0)
    logits = h @ params["w4"] + params["b4"]
    if output_dim == 1:
        return jax.nn.sigmoid(logits)
    return jax.nn.softmax(logits, axis=1)


if __name__ == "__main__":
    key = jax.random.PRNGKey(0)

    # --- test 1: softmax head, single-block path -------------------------------
    input_dim, output_dim = 32, 4
    batch = 16
    key, kx, kp = jax.random.split(key, 3)
    x = jax.random.normal(kx, (batch, input_dim), jnp.float32)
    params = init_params(kp, input_dim, output_dim)
    out = jax.block_until_ready(
        sequential_model_forward(x, params, output_dim=output_dim))
    ref = reference_forward(x, params, output_dim)
    assert out.shape == (batch, output_dim)
    assert jnp.allclose(out, ref, atol=1e-3, rtol=1e-3), "softmax mismatch"

    # --- test 2: softmax head, multi-block + masked partial edge block ---------
    batch2 = 1000                                  # bt=512, grid=(2,), partial tail
    key, kx2 = jax.random.split(key)
    x2 = jax.random.normal(kx2, (batch2, input_dim), jnp.float32)
    out2 = jax.block_until_ready(
        sequential_model_forward(x2, params, output_dim=output_dim))
    ref2 = reference_forward(x2, params, output_dim)
    assert out2.shape == (batch2, output_dim)
    assert jnp.allclose(out2, ref2, atol=1e-3, rtol=1e-3), "tiled softmax mismatch"

    # --- test 3: sigmoid head (output_dim == 1) ---------------------------------
    key, kx3, kp3 = jax.random.split(key, 3)
    params1 = init_params(kp3, input_dim, 1)
    x3 = jax.random.normal(kx3, (batch, input_dim), jnp.float32)
    out3 = jax.block_until_ready(
        sequential_model_forward(x3, params1, output_dim=1))
    ref3 = reference_forward(x3, params1, 1)
    assert out3.shape == (batch, 1)
    assert jnp.allclose(out3, ref3, atol=1e-3, rtol=1e-3), "sigmoid mismatch"

    print("KERNEL_OK")
</pallas_src>

<mosaic_0001>
module attributes {stable_mosaic.version = 11 : i64} {
  func.func @_mlp_kernel(%arg0: i32, %arg1: memref<16x32xf32, #tpu.memory_space<vmem>>, %arg2: memref<64x32xf32, #tpu.memory_space<vmem>>, %arg3: memref<64x1xf32, #tpu.memory_space<vmem>>, %arg4: memref<32x64xf32, #tpu.memory_space<vmem>>, %arg5: memref<32x1xf32, #tpu.memory_space<vmem>>, %arg6: memref<16x32xf32, #tpu.memory_space<vmem>>, %arg7: memref<16x1xf32, #tpu.memory_space<vmem>>, %arg8: memref<4x16xf32, #tpu.memory_space<vmem>>, %arg9: memref<4x1xf32, #tpu.memory_space<vmem>>, %arg10: memref<16x4xf32, #tpu.memory_space<vmem>>) attributes {dimension_semantics = [#tpu.dimension_semantics<parallel>], iteration_bounds = array<i64: 1>, scalar_prefetch = 0 : i64, scratch_operands = 0 : i64, tpu.core_type = #tpu.core_type<tc>, window_params = [{transform_indices = @transform_0, window_bounds = array<i64: 16, 32>}, {pipeline_mode = #tpu.pipeline_mode<synchronous>, transform_indices = @transform_1, window_bounds = array<i64: 64, 32>}, {pipeline_mode = #tpu.pipeline_mode<synchronous>, transform_indices = @transform_2, window_bounds = array<i64: 64, 1>}, {pipeline_mode = #tpu.pipeline_mode<synchronous>, transform_indices = @transform_3, window_bounds = array<i64: 32, 64>}, {pipeline_mode = #tpu.pipeline_mode<synchronous>, transform_indices = @transform_4, window_bounds = array<i64: 32, 1>}, {pipeline_mode = #tpu.pipeline_mode<synchronous>, transform_indices = @transform_5, window_bounds = array<i64: 16, 32>}, {pipeline_mode = #tpu.pipeline_mode<synchronous>, transform_indices = @transform_6, window_bounds = array<i64: 16, 1>}, {pipeline_mode = #tpu.pipeline_mode<synchronous>, transform_indices = @transform_7, window_bounds = array<i64: 4, 16>}, {pipeline_mode = #tpu.pipeline_mode<synchronous>, transform_indices = @transform_8, window_bounds = array<i64: 4, 1>}, {transform_indices = @transform_9, window_bounds = array<i64: 16, 4>}]} {
    %c0 = arith.constant 0 : index
    %c0_0 = arith.constant 0 : index
    %0 = vector.load %arg1[%c0, %c0_0] : memref<16x32xf32, #tpu.memory_space<vmem>>, vector<16x32xf32>
    %1 = tpu.transpose %0, [1, 0] : vector<16x32xf32> -> vector<32x16xf32>
    %c0_1 = arith.constant 0 : index
    %c0_2 = arith.constant 0 : index
    %2 = vector.load %arg2[%c0_1, %c0_2] : memref<64x32xf32, #tpu.memory_space<vmem>>, vector<64x32xf32>
    %cst = arith.constant dense<0.000000e+00> : vector<64x16xf32>
    %3 = tpu.matmul %2, %1, %cst {dimension_numbers = #tpu.dot_dimension_numbers<[1], [0], [0], [1], [0, 0, 1, 1], [], []>} : vector<64x32xf32>, vector<32x16xf32>, vector<64x16xf32> -> vector<64x16xf32>
    %c0_3 = arith.constant 0 : index
    %c0_4 = arith.constant 0 : index
    %4 = vector.load %arg3[%c0_3, %c0_4] : memref<64x1xf32, #tpu.memory_space<vmem>>, vector<64x1xf32>
    %5 = vector.broadcast %4 : vector<64x1xf32> to vector<64x16xf32>
    %6 = arith.addf %3, %5 : vector<64x16xf32>
    %cst_5 = arith.constant 0.000000e+00 : f32
    %7 = vector.broadcast %cst_5 : f32 to vector<64x16xf32>
    %8 = arith.maximumf %6, %7 : vector<64x16xf32>
    %c0_6 = arith.constant 0 : index
    %c0_7 = arith.constant 0 : index
    %9 = vector.load %arg4[%c0_6, %c0_7] : memref<32x64xf32, #tpu.memory_space<vmem>>, vector<32x64xf32>
    %cst_8 = arith.constant dense<0.000000e+00> : vector<32x16xf32>
    %10 = tpu.matmul %9, %8, %cst_8 {dimension_numbers = #tpu.dot_dimension_numbers<[1], [0], [0], [1], [0, 0, 1, 1], [], []>} : vector<32x64xf32>, vector<64x16xf32>, vector<32x16xf32> -> vector<32x16xf32>
    %c0_9 = arith.constant 0 : index
    %c0_10 = arith.constant 0 : index
    %11 = vector.load %arg5[%c0_9, %c0_10] : memref<32x1xf32, #tpu.memory_space<vmem>>, vector<32x1xf32>
    %12 = vector.broadcast %11 : vector<32x1xf32> to vector<32x16xf32>
    %13 = arith.addf %10, %12 : vector<32x16xf32>
    %cst_11 = arith.constant 0.000000e+00 : f32
    %14 = vector.broadcast %cst_11 : f32 to vector<32x16xf32>
    %15 = arith.maximumf %13, %14 : vector<32x16xf32>
    %c0_12 = arith.constant 0 : index
    %c0_13 = arith.constant 0 : index
    %16 = vector.load %arg6[%c0_12, %c0_13] : memref<16x32xf32, #tpu.memory_space<vmem>>, vector<16x32xf32>
    %cst_14 = arith.constant dense<0.000000e+00> : vector<16x16xf32>
    %17 = tpu.matmul %16, %15, %cst_14 {dimension_numbers = #tpu.dot_dimension_numbers<[1], [0], [0], [1], [0, 0, 1, 1], [], []>} : vector<16x32xf32>, vector<32x16xf32>, vector<16x16xf32> -> vector<16x16xf32>
    %c0_15 = arith.constant 0 : index
    %c0_16 = arith.constant 0 : index
    %18 = vector.load %arg7[%c0_15, %c0_16] : memref<16x1xf32, #tpu.memory_space<vmem>>, vector<16x1xf32>
    %19 = vector.broadcast %18 : vector<16x1xf32> to vector<16x16xf32>
    %20 = arith.addf %17, %19 : vector<16x16xf32>
    %cst_17 = arith.constant 0.000000e+00 : f32
    %21 = vector.broadcast %cst_17 : f32 to vector<16x16xf32>
    %22 = arith.maximumf %20, %21 : vector<16x16xf32>
    %c0_18 = arith.constant 0 : index
    %c0_19 = arith.constant 0 : index
    %23 = vector.load %arg8[%c0_18, %c0_19] : memref<4x16xf32, #tpu.memory_space<vmem>>, vector<4x16xf32>
    %cst_20 = arith.constant dense<0.000000e+00> : vector<4x16xf32>
    %24 = tpu.matmul %23, %22, %cst_20 {dimension_numbers = #tpu.dot_dimension_numbers<[1], [0], [0], [1], [0, 0, 1, 1], [], []>} : vector<4x16xf32>, vector<16x16xf32>, vector<4x16xf32> -> vector<4x16xf32>
    %c0_21 = arith.constant 0 : index
    %c0_22 = arith.constant 0 : index
    %25 = vector.load %arg9[%c0_21, %c0_22] : memref<4x1xf32, #tpu.memory_space<vmem>>, vector<4x1xf32>
    %26 = vector.broadcast %25 : vector<4x1xf32> to vector<4x16xf32>
    %27 = arith.addf %24, %26 : vector<4x16xf32>
    %cst_23 = arith.constant dense<0xFF800000> : vector<16xf32>
    %28 = vector.multi_reduction <maximumf>, %27, %cst_23 [0] : vector<4x16xf32> to vector<16xf32>
    %29 = vector.shape_cast %28 : vector<16xf32> to vector<1x16xf32>
    %30 = vector.broadcast %29 : vector<1x16xf32> to vector<4x16xf32>
    %31 = arith.subf %27, %30 : vector<4x16xf32>
    %32 = math.exp %31 : vector<4x16xf32>
    %cst_24 = arith.constant dense<0.000000e+00> : vector<16xf32>
    %33 = vector.multi_reduction <add>, %32, %cst_24 [0] : vector<4x16xf32> to vector<16xf32>
    %34 = vector.shape_cast %33 : vector<16xf32> to vector<1x16xf32>
    %35 = vector.broadcast %34 : vector<1x16xf32> to vector<4x16xf32>
    %36 = arith.divf %32, %35 : vector<4x16xf32>
    %37 = tpu.transpose %36, [1, 0] : vector<4x16xf32> -> vector<16x4xf32>
    %c0_25 = arith.constant 0 : index
    %c0_26 = arith.constant 0 : index
    %38 = vector.load %arg10[%c0_25, %c0_26] : memref<16x4xf32, #tpu.memory_space<vmem>>, vector<16x4xf32>
    tpu.vector_store %arg10[%c0_25, %c0_26], %37 {strides = array<i32>} : memref<16x4xf32, #tpu.memory_space<vmem>>, vector<16x4xf32>,
    return
  }
  func.func @transform_0(%arg0: i32) -> (i32, i32) {
    %c0_i32 = arith.constant 0 : i32
    %c0_i32_0 = arith.constant 0 : i32
    return %arg0, %c0_i32 : i32, i32
  }
  func.func @transform_1(%arg0: i32) -> (i32, i32) {
    %c0_i32 = arith.constant 0 : i32
    %c0_i32_0 = arith.constant 0 : i32
    %c0_i32_1 = arith.constant 0 : i32
    return %c0_i32, %c0_i32_0 : i32, i32
  }
  func.func @transform_2(%arg0: i32) -> (i32, i32) {
    %c0_i32 = arith.constant 0 : i32
    %c0_i32_0 = arith.constant 0 : i32
    %c0_i32_1 = arith.constant 0 : i32
    return %c0_i32, %c0_i32_0 : i32, i32
  }
  func.func @transform_3(%arg0: i32) -> (i32, i32) {
    %c0_i32 = arith.constant 0 : i32
    %c0_i32_0 = arith.constant 0 : i32
    %c0_i32_1 = arith.constant 0 : i32
    return %c0_i32, %c0_i32_0 : i32, i32
  }
  func.func @transform_4(%arg0: i32) -> (i32, i32) {
    %c0_i32 = arith.constant 0 : i32
    %c0_i32_0 = arith.constant 0 : i32
    %c0_i32_1 = arith.constant 0 : i32
    return %c0_i32, %c0_i32_0 : i32, i32
  }
  func.func @transform_5(%arg0: i32) -> (i32, i32) {
    %c0_i32 = arith.constant 0 : i32
    %c0_i32_0 = arith.constant 0 : i32
    %c0_i32_1 = arith.constant 0 : i32
    return %c0_i32, %c0_i32_0 : i32, i32
  }
  func.func @transform_6(%arg0: i32) -> (i32, i32) {
    %c0_i32 = arith.constant 0 : i32
    %c0_i32_0 = arith.constant 0 : i32
    %c0_i32_1 = arith.constant 0 : i32
    return %c0_i32, %c0_i32_0 : i32, i32
  }
  func.func @transform_7(%arg0: i32) -> (i32, i32) {
    %c0_i32 = arith.constant 0 : i32
    %c0_i32_0 = arith.constant 0 : i32
    %c0_i32_1 = arith.constant 0 : i32
    return %c0_i32, %c0_i32_0 : i32, i32
  }
  func.func @transform_8(%arg0: i32) -> (i32, i32) {
    %c0_i32 = arith.constant 0 : i32
    %c0_i32_0 = arith.constant 0 : i32
    %c0_i32_1 = arith.constant 0 : i32
    return %c0_i32, %c0_i32_0 : i32, i32
  }
  func.func @transform_9(%arg0: i32) -> (i32, i32) {
    %c0_i32 = arith.constant 0 : i32
    %c0_i32_0 = arith.constant 0 : i32
    return %arg0, %c0_i32 : i32, i32
  }
}

</mosaic_0001>

<llo_original>
// kernel: tpu_custom_call.1
$region0: #{tpu_custom_call.1}
  #allocation0 [shape = 'u32[]', space=smem, size = 0x4, offset = 0x4, fixed_abs, tag = 'smem constant byte address 0x4 - core index']
  #allocation1 [shape = 'u32[144,128]{1,0:T(1,128)}', space=vmem, size = 0x12000, scoped, tag = 'internal scratch']
  %s0 = inlined_call_operand.vmem [shape: f32[16,32], index: 0, kind: input, shape index: {}]
  %s1 = inlined_call_operand.vmem [shape: f32[64,32], index: 1, kind: input, shape index: {}]
  %s2 = inlined_call_operand.vmem [shape: f32[64,1], index: 2, kind: input, shape index: {}]
  %s3 = inlined_call_operand.vmem [shape: f32[32,64], index: 3, kind: input, shape index: {}]
  %s4 = inlined_call_operand.vmem [shape: f32[32,1], index: 4, kind: input, shape index: {}]
  %s5 = inlined_call_operand.vmem [shape: f32[16,32], index: 5, kind: input, shape index: {}]
  %s6 = inlined_call_operand.vmem [shape: f32[16,1], index: 6, kind: input, shape index: {}]
  %s7 = inlined_call_operand.vmem [shape: f32[4,16], index: 7, kind: input, shape index: {}]
  %s8 = inlined_call_operand.vmem [shape: f32[4,1], index: 8, kind: input, shape index: {}]
  %s9 = inlined_call_operand.vmem [shape: f32[16,4], index: 9, kind: output, shape index: {}]
  %s10 = sld [smem:[#allocation0]]
  $region46: #{tpu_custom_call.1} parent=0
    _
  %s12 = ssub.s32 1, %s10
  %s13 = scalar_select 0, %s12, %s10
  // Predicated region
  $region2: #{tpu_custom_call.1} parent=0 // pred_check
    _
  $region3: #{tpu_custom_call.1} parent=0 // pred_check_branch
    %15 = sbr.rel (0) target = $region5
  $region4: #{tpu_custom_call.1} parent=0 // pred_region
    _
  $region5: #{tpu_custom_call.1} parent=0 // pred_fallthru
    _
  // Predicated region
  $region6: #{tpu_custom_call.1} parent=0 // pred_check
    _
  $region7: #{tpu_custom_call.1} parent=0 // pred_check_branch
    %17 = sbr.rel (0) target = $region9
  $region8: #{tpu_custom_call.1} parent=0 // pred_region
    _
  $region9: #{tpu_custom_call.1} parent=0 // pred_fallthru
    _
  // Predicated region
  $region10: #{tpu_custom_call.1} parent=0 // pred_check
    _
  $region11: #{tpu_custom_call.1} parent=0 // pred_check_branch
    %19 = sbr.rel (0) target = $region13
  $region12: #{tpu_custom_call.1} parent=0 // pred_region
    _
  $region13: #{tpu_custom_call.1} parent=0 // pred_fallthru
    _
  // Predicated region
  $region14: #{tpu_custom_call.1} parent=0 // pred_check
    _
  $region15: #{tpu_custom_call.1} parent=0 // pred_check_branch
    %21 = sbr.rel (0) target = $region17
  $region16: #{tpu_custom_call.1} parent=0 // pred_region
    _
  $region17: #{tpu_custom_call.1} parent=0 // pred_fallthru
    _
  // Predicated region
  $region18: #{tpu_custom_call.1} parent=0 // pred_check
    _
  $region19: #{tpu_custom_call.1} parent=0 // pred_check_branch
    %23 = sbr.rel (0) target = $region21
  $region20: #{tpu_custom_call.1} parent=0 // pred_region
    _
  $region21: #{tpu_custom_call.1} parent=0 // pred_fallthru
    _
  // Predicated region
  $region22: #{tpu_custom_call.1} parent=0 // pred_check
    _
  $region23: #{tpu_custom_call.1} parent=0 // pred_check_branch
    %25 = sbr.rel (0) target = $region25
  $region24: #{tpu_custom_call.1} parent=0 // pred_region
    _
  $region25: #{tpu_custom_call.1} parent=0 // pred_fallthru
    _
  // Predicated region
  $region26: #{tpu_custom_call.1} parent=0 // pred_check
    _
  $region27: #{tpu_custom_call.1} parent=0 // pred_check_branch
    %27 = sbr.rel (0) target = $region29
  $region28: #{tpu_custom_call.1} parent=0 // pred_region
    _
  $region29: #{tpu_custom_call.1} parent=0 // pred_fallthru
    _
  // Predicated region
  $region30: #{tpu_custom_call.1} parent=0 // pred_check
    _
  $region31: #{tpu_custom_call.1} parent=0 // pred_check_branch
    %29 = sbr.rel (0) target = $region33
  $region32: #{tpu_custom_call.1} parent=0 // pred_region
    _
  $region33: #{tpu_custom_call.1} parent=0 // pred_fallthru
    _
  // Predicated region
  $region34: #{tpu_custom_call.1} parent=0 // pred_check
    _
  $region35: #{tpu_custom_call.1} parent=0 // pred_check_branch
    %31 = sbr.rel (0) target = $region37
  $region36: #{tpu_custom_call.1} parent=0 // pred_region
    _
  $region37: #{tpu_custom_call.1} parent=0 // pred_fallthru
    _
  %v32 = vld [vmem:[%s0] sm:$0xff]
  %v33 = vld [vmem:[%s0 + $0x8] sm:$0xff]
  %v34 = vld [vmem:[%s1] sm:$0xff]
  %v35 = vld [vmem:[%s1 + $0x8] sm:$0xff]
  %v36 = vld [vmem:[%s1 + $0x10] sm:$0xff]
  %v37 = vld [vmem:[%s1 + $0x18] sm:$0xff]
  %v38 = vld [vmem:[%s1 + $0x20] sm:$0xff]
  %v39 = vld [vmem:[%s1 + $0x28] sm:$0xff]
  %v40 = vld [vmem:[%s1 + $0x30] sm:$0xff]
  %v41 = vld [vmem:[%s1 + $0x38] sm:$0xff]
  %v42 = vld [vmem:[%s2] sm:$0xff]
  %v43 = vld [vmem:[%s2 + $0x8] sm:$0xff]
  %v44 = vld [vmem:[%s2 + $0x10] sm:$0xff]
  %v45 = vld [vmem:[%s2 + $0x18] sm:$0xff]
  %v46 = vld [vmem:[%s2 + $0x20] sm:$0xff]
  %v47 = vld [vmem:[%s2 + $0x28] sm:$0xff]
  %v48 = vld [vmem:[%s2 + $0x30] sm:$0xff]
  %v49 = vld [vmem:[%s2 + $0x38] sm:$0xff]
  %51 = vset.pattern.permute.xlu0 0
  %52 = vperm.xlu0 %51, %v42
  %v53 = vpop.permute.xlu0 %52
  %56 = vset.pattern.permute.xlu0 0
  %57 = vperm.xlu0 %56, %v43
  %v58 = vpop.permute.xlu0 %57
  %61 = vset.pattern.permute.xlu0 0
  %62 = vperm.xlu0 %61, %v44
  %v63 = vpop.permute.xlu0 %62
  %66 = vset.pattern.permute.xlu0 0
  %67 = vperm.xlu0 %66, %v45
  %v68 = vpop.permute.xlu0 %67
  %71 = vset.pattern.permute.xlu0 0
  %72 = vperm.xlu0 %71, %v46
  %v73 = vpop.permute.xlu0 %72
  %76 = vset.pattern.permute.xlu0 0
  %77 = vperm.xlu0 %76, %v47
  %v78 = vpop.permute.xlu0 %77
  %81 = vset.pattern.permute.xlu0 0
  %82 = vperm.xlu0 %81, %v48
  %v83 = vpop.permute.xlu0 %82
  %86 = vset.pattern.permute.xlu0 0
  %87 = vperm.xlu0 %86, %v49
  %v88 = vpop.permute.xlu0 %87
  %vm90 = vcmask 261120
  %v92 = vsel %vm90, %v34, 0
  %v95 = vsel %vm90, %v35, 0
  %v98 = vsel %vm90, %v36, 0
  %v101 = vsel %vm90, %v37, 0
  %v104 = vsel %vm90, %v38, 0
  %v107 = vsel %vm90, %v39, 0
  %v110 = vsel %vm90, %v40, 0
  %v113 = vsel %vm90, %v41, 0
  %v116 = vsel %vm90, %v32, 0
  %v119 = vsel %vm90, %v33, 0
  %121 = vmatprep.subr.mxu0 0.0
  %122 = vmatpush1.xpose.msra.mxu0 %v116
  %123 = vmatprep.subr.mxu0 0.0
  %124 = vmatpush1.xpose.msra.mxu0 %v119
  %125 = vmatprep.subr.mxu0 0.0
  %126 = vmatpush1.xpose.msra.mxu0 0.0
  %127 = vmatprep.subr.mxu0 0.0
  %128 = vmatpush1.xpose.msra.mxu0 0.0
  %129 = vmatprep.subr.mxu0 0.0
  %130 = vmatpush1.xpose.msra.mxu0 0.0
  %131 = vmatprep.subr.mxu0 0.0
  %132 = vmatpush1.xpose.msra.mxu0 0.0
  %133 = vmatprep.subr.mxu0 0.0
  %134 = vmatpush1.xpose.msra.mxu0 0.0
  %135 = vmatprep.subr.mxu0 0.0
  %136 = vmatpush1.xpose.msra.mxu0 0.0
  %137 = vmatprep.subr.mxu0 0.0
  %138 = vmatpush1.xpose.msra.mxu0 0.0
  %139 = vmatprep.subr.mxu0 0.0
  %140 = vmatpush1.xpose.msra.mxu0 0.0
  %141 = vmatprep.subr.mxu0 0.0
  %142 = vmatpush1.xpose.msra.mxu0 0.0
  %143 = vmatprep.subr.mxu0 0.0
  %144 = vmatpush1.xpose.msra.mxu0 0.0
  %145 = vmatprep.subr.mxu0 0.0
  %146 = vmatpush1.xpose.msra.mxu0 0.0
  %147 = vmatprep.subr.mxu0 0.0
  %148 = vmatpush1.xpose.msra.mxu0 0.0
  %149 = vmatprep.subr.mxu0 0.0
  %150 = vmatpush1.xpose.msra.mxu0 0.0
  %151 = vmatprep.subr.mxu0 0.0
  %152 = vmatpush1.xpose.msra.mxu0 0.0
  %153 = vmatprep.subr.mxu0 0.0
  %154 = vmatpush1.xpose.msra.mxu0 0.0
  %155 = vmatprep.subr.mxu0 0.0
  %156 = vmatpush1.xpose.msra.mxu0 0.0
  %157 = vmatprep.subr.mxu0 0.0
  %158 = vmatpush1.xpose.msra.mxu0 0.0
  %159 = vmatprep.subr.mxu0 0.0
  %160 = vmatpush1.xpose.msra.mxu0 0.0
  %161 = vmatprep.subr.mxu0 0.0
  %162 = vmatpush1.xpose.msra.mxu0 0.0
  %163 = vmatprep.subr.mxu0 0.0
  %164 = vmatpush1.xpose.msra.mxu0 0.0
  %165 = vmatprep.subr.mxu0 0.0
  %166 = vmatpush1.xpose.msra.mxu0 0.0
  %167 = vmatprep.subr.mxu0 0.0
  %168 = vmatpush1.xpose.msra.mxu0 0.0
  %169 = vmatprep.subr.mxu0 0.0
  %170 = vmatpush1.xpose.msra.mxu0 0.0
  %171 = vmatprep.subr.mxu0 0.0
  %172 = vmatpush1.xpose.msra.mxu0 0.0
  %173 = vmatprep.subr.mxu0 0.0
  %174 = vmatpush1.xpose.msra.mxu0 0.0
  %175 = vmatprep.subr.mxu0 0.0
  %176 = vmatpush1.xpose.msra.mxu0 0.0
  %177 = vmatprep.subr.mxu0 0.0
  %178 = vmatpush1.xpose.msra.mxu0 0.0
  %179 = vmatprep.subr.mxu0 0.0
  %180 = vmatpush1.xpose.msra.mxu0 0.0
  %181 = vmatprep.subr.mxu0 0.0
  %182 = vmatpush1.xpose.msra.mxu0 0.0
  %183 = vmatprep.subr.mxu0 0.0
  %184 = vmatpush1.xpose.msra.mxu0 0.0
  %185 = vmatprep.mubr.f32.mxu0 0.0
  %186 = vmatmul.mubr.f32.gmra.mrb[0].mxu0 %v92
  %v187 = vpop.f32.mrb[0].mxu0
  %v188 = vadd.f32 %v53, %v187
  %v189 = vpop.f32.mrb[0].mxu0
  %190 = vmatprep.mubr.f32.mxu0 0.0
  %191 = vmatmul.mubr.f32.gmra.mrb[0].mxu0 %v95
  %v192 = vpop.f32.mrb[0].mxu0
  %v193 = vadd.f32 %v58, %v192
  %v194 = vpop.f32.mrb[0].mxu0
  %195 = vmatprep.mubr.f32.mxu0 0.0
  %196 = vmatmul.mubr.f32.gmra.mrb[0].mxu0 %v98
  %v197 = vpop.f32.mrb[0].mxu0
  %v198 = vadd.f32 %v63, %v197
  %v199 = vpop.f32.mrb[0].mxu0
  %200 = vmatprep.mubr.f32.mxu0 0.0
  %201 = vmatmul.mubr.f32.gmra.mrb[0].mxu0 %v101
  %v202 = vpop.f32.mrb[0].mxu0
  %v203 = vadd.f32 %v68, %v202
  %v204 = vpop.f32.mrb[0].mxu0
  %205 = vmatprep.mubr.f32.mxu0 0.0
  %206 = vmatmul.mubr.f32.gmra.mrb[0].mxu0 %v104
  %v207 = vpop.f32.mrb[0].mxu0
  %v208 = vadd.f32 %v73, %v207
  %v209 = vpop.f32.mrb[0].mxu0
  %210 = vmatprep.mubr.f32.mxu0 0.0
  %211 = vmatmul.mubr.f32.gmra.mrb[0].mxu0 %v107
  %v212 = vpop.f32.mrb[0].mxu0
  %v213 = vadd.f32 %v78, %v212
  %v214 = vpop.f32.mrb[0].mxu0
  %215 = vmatprep.mubr.f32.mxu0 0.0
  %216 = vmatmul.mubr.f32.gmra.mrb[0].mxu0 %v110
  %v217 = vpop.f32.mrb[0].mxu0
  %v218 = vadd.f32 %v83, %v217
  %v219 = vpop.f32.mrb[0].mxu0
  %220 = vmatprep.mubr.f32.mxu0 0.0
  %221 = vmatmul.mubr.f32.gmra.mrb[0].mxu0 %v113
  %v222 = vpop.f32.mrb[0].mxu0
  %v223 = vadd.f32 %v88, %v222
  %v224 = vpop.f32.mrb[0].mxu0
  %225 = vdwg.mxu0
  %v226 = vmax.f32 %v188, 0.0
  %v227 = vmax.f32 %v193, 0.0
  %v228 = vmax.f32 %v198, 0.0
  %v229 = vmax.f32 %v203, 0.0
  %v230 = vmax.f32 %v208, 0.0
  %v231 = vmax.f32 %v213, 0.0
  %v232 = vmax.f32 %v218, 0.0
  %v233 = vmax.f32 %v223, 0.0
  %v234 = vld [vmem:[%s3] sm:$0xff]
  %v235 = vld [vmem:[%s3 + $0x8] sm:$0xff]
  %v236 = vld [vmem:[%s3 + $0x10] sm:$0xff]
  %v237 = vld [vmem:[%s3 + $0x18] sm:$0xff]
  %v238 = vld [vmem:[%s4] sm:$0xff]
  %v239 = vld [vmem:[%s4 + $0x8] sm:$0xff]
  %v240 = vld [vmem:[%s4 + $0x10] sm:$0xff]
  %v241 = vld [vmem:[%s4 + $0x18] sm:$0xff]
  %243 = vset.pattern.permute.xlu0 0
  %244 = vperm.xlu0 %243, %v238
  %v245 = vpop.permute.xlu0 %244
  %248 = vset.pattern.permute.xlu0 0
  %249 = vperm.xlu0 %248, %v239
  %v250 = vpop.permute.xlu0 %249
  %253 = vset.pattern.permute.xlu0 0
  %254 = vperm.xlu0 %253, %v240
  %v255 = vpop.permute.xlu0 %254
  %258 = vset.pattern.permute.xlu0 0
  %259 = vperm.xlu0 %258, %v241
  %v260 = vpop.permute.xlu0 %259
  %vm262 = vcmask 523264
  %v264 = vsel %vm262, %v234, 0
  %v267 = vsel %vm262, %v235, 0
  %v270 = vsel %vm262, %v236, 0
  %v273 = vsel %vm262, %v237, 0
  %275 = vmatprep.subr.mxu0 0.0
  %276 = vmatpush1.msra.mxu0 %v226
  %277 = vmatprep.subr.mxu0 0.0
  %278 = vmatpush1.msra.mxu0 %v227
  %279 = vmatprep.subr.mxu0 0.0
  %280 = vmatpush1.msra.mxu0 %v228
  %281 = vmatprep.subr.mxu0 0.0
  %282 = vmatpush1.msra.mxu0 %v229
  %283 = vmatprep.subr.mxu0 0.0
  %284 = vmatpush1.msra.mxu0 %v230
  %285 = vmatprep.subr.mxu0 0.0
  %286 = vmatpush1.msra.mxu0 %v231
  %287 = vmatprep.subr.mxu0 0.0
  %288 = vmatpush1.msra.mxu0 %v232
  %289 = vmatprep.subr.mxu0 0.0
  %290 = vmatpush1.msra.mxu0 %v233
  %291 = vmatprep.subr.mxu0 0.0
  %292 = vmatpush1.msra.mxu0 0.0
  %293 = vmatprep.subr.mxu0 0.0
  %294 = vmatpush1.msra.mxu0 0.0
  %295 = vmatprep.subr.mxu0 0.0
  %296 = vmatpush1.msra.mxu0 0.0
  %297 = vmatprep.subr.mxu0 0.0
  %298 = vmatpush1.msra.mxu0 0.0
  %299 = vmatprep.subr.mxu0 0.0
  %300 = vmatpush1.msra.mxu0 0.0
  %301 = vmatprep.subr.mxu0 0.0
  %302 = vmatpush1.msra.mxu0 0.0
  %303 = vmatprep.subr.mxu0 0.0
  %304 = vmatpush1.msra.mxu0 0.0
  %305 = vmatprep.subr.mxu0 0.0
  %306 = vmatpush1.msra.mxu0 0.0
  %307 = vmatprep.subr.mxu0 0.0
  %308 = vmatpush1.msra.mxu0 0.0
  %309 = vmatprep.subr.mxu0 0.0
  %310 = vmatpush1.msra.mxu0 0.0
  %311 = vmatprep.subr.mxu0 0.0
  %312 = vmatpush1.msra.mxu0 0.0
  %313 = vmatprep.subr.mxu0 0.0
  %314 = vmatpush1.msra.mxu0 0.0
  %315 = vmatprep.subr.mxu0 0.0
  %316 = vmatpush1.msra.mxu0 0.0
  %317 = vmatprep.subr.mxu0 0.0
  %318 = vmatpush1.msra.mxu0 0.0
  %319 = vmatprep.subr.mxu0 0.0
  %320 = vmatpush1.msra.mxu0 0.0
  %321 = vmatprep.subr.mxu0 0.0
  %322 = vmatpush1.msra.mxu0 0.0
  %323 = vmatprep.subr.mxu0 0.0
  %324 = vmatpush1.msra.mxu0 0.0
  %325 = vmatprep.subr.mxu0 0.0
  %326 = vmatpush1.msra.mxu0 0.0
  %327 = vmatprep.subr.mxu0 0.0
  %328 = vmatpush1.msra.mxu0 0.0
  %329 = vmatprep.subr.mxu0 0.0
  %330 = vmatpush1.msra.mxu0 0.0
  %331 = vmatprep.subr.mxu0 0.0
  %332 = vmatpush1.msra.mxu0 0.0
  %333 = vmatprep.subr.mxu0 0.0
  %334 = vmatpush1.msra.mxu0 0.0
  %335 = vmatprep.subr.mxu0 0.0
  %336 = vmatpush1.msra.mxu0 0.0
  %337 = vmatprep.subr.mxu0 0.0
  %338 = vmatpush1.msra.mxu0 0.0
  %339 = vmatprep.mubr.f32.mxu0 0.0
  %340 = vmatmul.mubr.f32.gmra.mrb[0].mxu0 %v264
  %v341 = vpop.f32.mrb[0].mxu0
  %v342 = vadd.f32 %v245, %v341
  %v343 = vpop.f32.mrb[0].mxu0
  %344 = vmatprep.mubr.f32.mxu0 0.0
  %345 = vmatmul.mubr.f32.gmra.mrb[0].mxu0 %v267
  %v346 = vpop.f32.mrb[0].mxu0
  %v347 = vadd.f32 %v250, %v346
  %v348 = vpop.f32.mrb[0].mxu0
  %349 = vmatprep.mubr.f32.mxu0 0.0
  %350 = vmatmul.mubr.f32.gmra.mrb[0].mxu0 %v270
  %v351 = vpop.f32.mrb[0].mxu0
  %v352 = vadd.f32 %v255, %v351
  %v353 = vpop.f32.mrb[0].mxu0
  %354 = vmatprep.mubr.f32.mxu0 0.0
  %355 = vmatmul.mubr.f32.gmra.mrb[0].mxu0 %v273
  %v356 = vpop.f32.mrb[0].mxu0
  %v357 = vadd.f32 %v260, %v356
  %v358 = vpop.f32.mrb[0].mxu0
  %359 = vdwg.mxu0
  %v360 = vmax.f32 %v342, 0.0
  %v361 = vmax.f32 %v347, 0.0
  %v362 = vmax.f32 %v352, 0.0
  %v363 = vmax.f32 %v357, 0.0
  %v364 = vld [vmem:[%s5] sm:$0xff]
  %v365 = vld [vmem:[%s5 + $0x8] sm:$0xff]
  %v366 = vld [vmem:[%s6] sm:$0xff]
  %v367 = vld [vmem:[%s6 + $0x8] sm:$0xff]
  %369 = vset.pattern.permute.xlu0 0
  %370 = vperm.xlu0 %369, %v366
  %v371 = vpop.permute.xlu0 %370
  %374 = vset.pattern.permute.xlu0 0
  %375 = vperm.xlu0 %374, %v367
  %v376 = vpop.permute.xlu0 %375
  %v379 = vsel %vm90, %v364, 0
  %v382 = vsel %vm90, %v365, 0
  %384 = vmatprep.subr.mxu0 0.0
  %385 = vmatpush1.msra.mxu0 %v360
  %386 = vmatprep.subr.mxu0 0.0
  %387 = vmatpush1.msra.mxu0 %v361
  %388 = vmatprep.subr.mxu0 0.0
  %389 = vmatpush1.msra.mxu0 %v362
  %390 = vmatprep.subr.mxu0 0.0
  %391 = vmatpush1.msra.mxu0 %v363
  %392 = vmatprep.subr.mxu0 0.0
  %393 = vmatpush1.msra.mxu0 0.0
  %394 = vmatprep.subr.mxu0 0.0
  %395 = vmatpush1.msra.mxu0 0.0
  %396 = vmatprep.subr.mxu0 0.0
  %397 = vmatpush1.msra.mxu0 0.0
  %398 = vmatprep.subr.mxu0 0.0
  %399 = vmatpush1.msra.mxu0 0.0
  %400 = vmatprep.subr.mxu0 0.0
  %401 = vmatpush1.msra.mxu0 0.0
  %402 = vmatprep.subr.mxu0 0.0
  %403 = vmatpush1.msra.mxu0 0.0
  %404 = vmatprep.subr.mxu0 0.0
  %405 = vmatpush1.msra.mxu0 0.0
  %406 = vmatprep.subr.mxu0 0.0
  %407 = vmatpush1.msra.mxu0 0.0
  %408 = vmatprep.subr.mxu0 0.0
  %409 = vmatpush1.msra.mxu0 0.0
  %410 = vmatprep.subr.mxu0 0.0
  %411 = vmatpush1.msra.mxu0 0.0
  %412 = vmatprep.subr.mxu0 0.0
  %413 = vmatpush1.msra.mxu0 0.0
  %414 = vmatprep.subr.mxu0 0.0
  %415 = vmatpush1.msra.mxu0 0.0
  %416 = vmatprep.subr.mxu0 0.0
  %417 = vmatpush1.msra.mxu0 0.0
  %418 = vmatprep.subr.mxu0 0.0
  %419 = vmatpush1.msra.mxu0 0.0
  %420 = vmatprep.subr.mxu0 0.0
  %421 = vmatpush1.msra.mxu0 0.0
  %422 = vmatprep.subr.mxu0 0.0
  %423 = vmatpush1.msra.mxu0 0.0
  %424 = vmatprep.subr.mxu0 0.0
  %425 = vmatpush1.msra.mxu0 0.0
  %426 = vmatprep.subr.mxu0 0.0
  %427 = vmatpush1.msra.mxu0 0.0
  %428 = vmatprep.subr.mxu0 0.0
  %429 = vmatpush1.msra.mxu0 0.0
  %430 = vmatprep.subr.mxu0 0.0
  %431 = vmatpush1.msra.mxu0 0.0
  %432 = vmatprep.subr.mxu0 0.0
  %433 = vmatpush1.msra.mxu0 0.0
  %434 = vmatprep.subr.mxu0 0.0
  %435 = vmatpush1.msra.mxu0 0.0
  %436 = vmatprep.subr.mxu0 0.0
  %437 = vmatpush1.msra.mxu0 0.0
  %438 = vmatprep.subr.mxu0 0.0
  %439 = vmatpush1.msra.mxu0 0.0
  %440 = vmatprep.subr.mxu0 0.0
  %441 = vmatpush1.msra.mxu0 0.0
  %442 = vmatprep.subr.mxu0 0.0
  %443 = vmatpush1.msra.mxu0 0.0
  %444 = vmatprep.subr.mxu0 0.0
  %445 = vmatpush1.msra.mxu0 0.0
  %446 = vmatprep.subr.mxu0 0.0
  %447 = vmatpush1.msra.mxu0 0.0
  %448 = vmatprep.mubr.f32.mxu0 0.0
  %449 = vmatmul.mubr.f32.gmra.mrb[0].mxu0 %v379
  %v450 = vpop.f32.mrb[0].mxu0
  %v451 = vadd.f32 %v371, %v450
  %v452 = vpop.f32.mrb[0].mxu0
  %453 = vmatprep.mubr.f32.mxu0 0.0
  %454 = vmatmul.mubr.f32.gmra.mrb[0].mxu0 %v382
  %v455 = vpop.f32.mrb[0].mxu0
  %v456 = vadd.f32 %v376, %v455
  %v457 = vpop.f32.mrb[0].mxu0
  %458 = vdwg.mxu0
  %v459 = vmax.f32 %v451, 0.0
  %v460 = vmax.f32 %v456, 0.0
  %v461 = vld [vmem:[%s7] sm:$0xf]
  %v462 = vld [vmem:[%s8] sm:$0xf]
  %464 = vset.pattern.permute.xlu0 0
  %465 = vperm.xlu0 %464, %v462
  %v466 = vpop.permute.xlu0 %465
  %vm468 = vcmask 130048
  %v470 = vsel %vm468, %v461, 0
  %472 = vmatprep.subr.mxu0 0.0
  %473 = vmatpush1.msra.mxu0 %v459
  %474 = vmatprep.subr.mxu0 0.0
  %475 = vmatpush1.msra.mxu0 %v460
  %476 = vmatprep.subr.mxu0 0.0
  %477 = vmatpush1.msra.mxu0 0.0
  %478 = vmatprep.subr.mxu0 0.0
  %479 = vmatpush1.msra.mxu0 0.0
  %480 = vmatprep.subr.mxu0 0.0
  %481 = vmatpush1.msra.mxu0 0.0
  %482 = vmatprep.subr.mxu0 0.0
  %483 = vmatpush1.msra.mxu0 0.0
  %484 = vmatprep.subr.mxu0 0.0
  %485 = vmatpush1.msra.mxu0 0.0
  %486 = vmatprep.subr.mxu0 0.0
  %487 = vmatpush1.msra.mxu0 0.0
  %488 = vmatprep.subr.mxu0 0.0
  %489 = vmatpush1.msra.mxu0 0.0
  %490 = vmatprep.subr.mxu0 0.0
  %491 = vmatpush1.msra.mxu0 0.0
  %492 = vmatprep.subr.mxu0 0.0
  %493 = vmatpush1.msra.mxu0 0.0
  %494 = vmatprep.subr.mxu0 0.0
  %495 = vmatpush1.msra.mxu0 0.0
  %496 = vmatprep.subr.mxu0 0.0
  %497 = vmatpush1.msra.mxu0 0.0
  %498 = vmatprep.subr.mxu0 0.0
  %499 = vmatpush1.msra.mxu0 0.0
  %500 = vmatprep.subr.mxu0 0.0
  %501 = vmatpush1.msra.mxu0 0.0
  %502 = vmatprep.subr.mxu0 0.0
  %503 = vmatpush1.msra.mxu0 0.0
  %504 = vmatprep.subr.mxu0 0.0
  %505 = vmatpush1.msra.mxu0 0.0
  %506 = vmatprep.subr.mxu0 0.0
  %507 = vmatpush1.msra.mxu0 0.0
  %508 = vmatprep.subr.mxu0 0.0
  %509 = vmatpush1.msra.mxu0 0.0
  %510 = vmatprep.subr.mxu0 0.0
  %511 = vmatpush1.msra.mxu0 0.0
  %512 = vmatprep.subr.mxu0 0.0
  %513 = vmatpush1.msra.mxu0 0.0
  %514 = vmatprep.subr.mxu0 0.0
  %515 = vmatpush1.msra.mxu0 0.0
  %516 = vmatprep.subr.mxu0 0.0
  %517 = vmatpush1.msra.mxu0 0.0
  %518 = vmatprep.subr.mxu0 0.0
  %519 = vmatpush1.msra.mxu0 0.0
  %520 = vmatprep.subr.mxu0 0.0
  %521 = vmatpush1.msra.mxu0 0.0
  %522 = vmatprep.subr.mxu0 0.0
  %523 = vmatpush1.msra.mxu0 0.0
  %524 = vmatprep.subr.mxu0 0.0
  %525 = vmatpush1.msra.mxu0 0.0
  %526 = vmatprep.subr.mxu0 0.0
  %527 = vmatpush1.msra.mxu0 0.0
  %528 = vmatprep.subr.mxu0 0.0
  %529 = vmatpush1.msra.mxu0 0.0
  %530 = vmatprep.subr.mxu0 0.0
  %531 = vmatpush1.msra.mxu0 0.0
  %532 = vmatprep.subr.mxu0 0.0
  %533 = vmatpush1.msra.mxu0 0.0
  %534 = vmatprep.subr.mxu0 0.0
  %535 = vmatpush1.msra.mxu0 0.0
  %536 = vmatprep.mubr.f32.mxu0 0.0
  %537 = vmatmul.mubr.f32.gmra.mrb[0].mxu0 %v470
  %v538 = vpop.f32.mrb[0].mxu0
  %v539 = vadd.f32 %v466, %v538
  %v540 = vpop.f32.mrb[0].mxu0
  %541 = vdwg.mxu0
  %vm542 = vcmask 125952
  %v543 = vsel %vm542, %v539, -inf
  %v544 = vrot.slane %v543, 4
  %v545 = vmax.f32 %v543, %v544
  %v546 = vrot.slane %v545, 2
  %v547 = vmax.f32 %v545, %v546
  %v548 = vrot.slane %v547, 1
  %v549 = vmax.f32 %v547, %v548
  %v550 = vsub.f32 %v539, %v549
  %v551 = vmul.f32 %v550, 1.442695
  %v552 = vpow.pop %v551
  %v553 = vsel %vm542, %v552, 0.0
  %v554 = vrot.slane %v553, 4
  %v555 = vadd.f32 %v553, %v554
  %v556 = vrot.slane %v555, 2
  %v557 = vadd.f32 %v555, %v556
  %v558 = vrot.slane %v557, 1
  %v559 = vadd.f32 %v557, %v558
  %v560 = vrcp.pop %v559
  %v561 = vmul.f32 %v552, %v560
  %562 = vxpose.xlu0.b32.start [1/16] %v561, 128
  %563 = vxpose.xlu0.b32.cont [2/16] 0.0, 128
  %564 = vxpose.xlu0.b32.cont [3/16] 0.0, 128
  %565 = vxpose.xlu0.b32.cont [4/16] 0.0, 128
  %566 = vxpose.xlu0.b32.cont [5/16] 0.0, 128
  %567 = vxpose.xlu0.b32.cont [6/16] 0.0, 128
  %568 = vxpose.xlu0.b32.cont [7/16] 0.0, 128
  %569 = vxpose.xlu0.b32.cont [8/16] 0.0, 128
  %570 = vxpose.xlu0.b32.cont [9/16] 0.0, 128
  %571 = vxpose.xlu0.b32.cont [10/16] 0.0, 128
  %572 = vxpose.xlu0.b32.cont [11/16] 0.0, 128
  %573 = vxpose.xlu0.b32.cont [12/16] 0.0, 128
  %574 = vxpose.xlu0.b32.cont [13/16] 0.0, 128
  %575 = vxpose.xlu0.b32.cont [14/16] 0.0, 128
  %576 = vxpose.xlu0.b32.cont [15/16] 0.0, 128
  %577 = vxpose.xlu0.b32.end [16/16] 0.0, 128
  %v578 = vpop.trf.xlu0
  %v579 = vpop.trf.xlu0
  %v580 = vpop.trf.xlu0
  %v581 = vpop.trf.xlu0
  %v582 = vpop.trf.xlu0
  %v583 = vpop.trf.xlu0
  %v584 = vpop.trf.xlu0
  %v585 = vpop.trf.xlu0
  %v586 = vpop.trf.xlu0
  %v587 = vpop.trf.xlu0
  %v588 = vpop.trf.xlu0
  %v589 = vpop.trf.xlu0
  %v590 = vpop.trf.xlu0
  %v591 = vpop.trf.xlu0
  %v592 = vpop.trf.xlu0
  %v593 = vpop.trf.xlu0
  %vm594 = vcmask 31744
  %595 = vst.msk [vmem:[%s9] sm:$0xff] %vm594, %v578
  %596 = vst.msk [vmem:[%s9 + $0x8] sm:$0xff] %vm594, %v579
  // Predicated region
  $region38: #{tpu_custom_call.1} parent=0 // pred_check
    _
  $region39: #{tpu_custom_call.1} parent=0 // pred_check_branch
    %598 = sbr.rel (0) target = $region41
  $region40: #{tpu_custom_call.1} parent=0 // pred_region
    _
  $region41: #{tpu_custom_call.1} parent=0 // pred_fallthru
    _
  // Predicated region
  $region42: #{tpu_custom_call.1} parent=0 // pred_check
    _
  $region43: #{tpu_custom_call.1} parent=0 // pred_check_branch
    %600 = sbr.rel (0) target = $region45
  $region44: #{tpu_custom_call.1} parent=0 // pred_region
    _
  $region45: #{tpu_custom_call.1} parent=0 // pred_fallthru
    _

</llo_original>
